<compile_context>
chip_gen: v6e
topology: v6e:2x2x1
jax: 0.10.0
libtpu: 0.0.40
codegen_flags: <defaults>
</compile_context>

<pallas_src>
import functools

import jax
import jax.numpy as jnp
from jax.experimental import pallas as pl
from jax.experimental.pallas import tpu as pltpu


# --------------------------------------------------------------------------
# Kernels
# --------------------------------------------------------------------------
def _se_fused_kernel(x_ref, w1_ref, b1_ref, w2_ref, b2_ref, o_ref, *, inv_s, use_mxu):
    """Pool + gate + scale for one sample's resident (C, S) slab."""
    x_f = x_ref[0].astype(jnp.float32)                                  # (C, S)
    means = jnp.sum(x_f, axis=-1, keepdims=True) * inv_s                # (C, 1)
    if use_mxu:
        # fc1 / fc2 as MXU matmuls; avoids the (C, MID) broadcast intermediate.
        h = jnp.dot(w1_ref[...], means,
                    preferred_element_type=jnp.float32) + b1_ref[...]   # (MID, 1)
        h = jnp.maximum(h, 0.0)
        logits = jnp.dot(w2_ref[...], h,
                         preferred_element_type=jnp.float32) + b2_ref[...]  # (C, 1)
    else:
        # Tiny-layer path: broadcast-multiply + reduce (no matmul padding).
        h = jnp.sum(w1_ref[...] * means, axis=0, keepdims=True) + b1_ref[...]   # (1, MID)
        h = jnp.maximum(h, 0.0)
        logits = jnp.sum(w2_ref[...] * h, axis=1, keepdims=True) + b2_ref[...]  # (C, 1)
    gate = 1.0 / (1.0 + jnp.exp(-logits))                               # sigmoid (exp on EUP)
    o_ref[0] = (x_f * gate).astype(o_ref.dtype)                         # f32 multiply, 1 cast


def _se_pool_kernel(x_ref, sum_ref):
    """Fallback pass 1: accumulate per-(sample, channel) sums over spatial chunks."""
    @pl.when(pl.program_id(2) == 0)
    def _():
        sum_ref[...] = jnp.zeros_like(sum_ref)

    sum_ref[...] += jnp.sum(x_ref[...].astype(jnp.float32), axis=-1, keepdims=True)


def _se_scale_kernel(x_ref, g_ref, o_ref):
    """Fallback pass 2: out = x * gate (gate broadcast across the spatial/lane axis)."""
    o_ref[...] = (x_ref[...].astype(jnp.float32) * g_ref[...]).astype(o_ref.dtype)


# --------------------------------------------------------------------------
# Helpers
# --------------------------------------------------------------------------
def _pick_chunk(n, candidates):
    for c in candidates:
        if c <= n and n % c == 0:
            return c
    return n


def _largest_divisor_leq(n, cap):
    cap = int(max(1, min(n, cap)))
    for d in range(cap, 0, -1):
        if n % d == 0:
            return d
    return 1


def _vmem_capacity_bytes():
    try:
        return int(pltpu.get_tpu_info().vmem_capacity_bytes)
    except Exception:
        return 64 << 20  # conservative: v7x per-TensorCore VMEM


def _vmem_limit(nbytes, vmem_cap):
    cap = max(vmem_cap - (16 << 20), 32 << 20)
    return int(min(max(int(nbytes), 8 << 20), cap))


def prepare_se_params(w1, b1, w2, b2):
    """Hoisted per-layer preprocessing (dtype casts / transposes / reshapes)."""
    mid, c = w1.shape
    w1f = jnp.asarray(w1, jnp.float32)          # (MID, C) = fc1.weight
    b1f = jnp.asarray(b1, jnp.float32)          # (MID,)
    w2f = jnp.asarray(w2, jnp.float32)          # (C, MID) = fc2.weight
    b2f = jnp.asarray(b2, jnp.float32)          # (C,)
    use_mxu = (c >= 128) and (mid >= 8)
    return {
        "C": c, "MID": mid, "use_mxu": use_mxu,
        # fused-kernel operands
        "w1k": w1f if use_mxu else w1f.T,
        "b1k": b1f.reshape(mid, 1) if use_mxu else b1f.reshape(1, mid),
        "w2k": w2f,
        "b2k": b2f.reshape(c, 1),
        # plain-JAX fallback-gate operands
        "w1t": w1f.T,                            # (C, MID)
        "w2t": w2f.T,                            # (MID, C)
        "b1_row": b1f.reshape(1, mid),
        "b2_row": b2f.reshape(1, c),
    }


# --------------------------------------------------------------------------
# Forward paths
# --------------------------------------------------------------------------
def _se_fused(x3, params, vmem_cap):
    """Single pallas_call: pool + gate + scale on a resident per-sample slab."""
    B, C, S = x3.shape
    MID = params["MID"]
    itemsize = x3.dtype.itemsize
    slab = C * S * itemsize
    wbytes = (2 * C * MID + C + MID) * 4
    # double-buffered in + out slabs, f32 working copies, double-buffered weights, slack
    vmem = 4 * slab + 2 * C * S * 4 + 2 * wbytes + (2 << 20)

    kernel = functools.partial(_se_fused_kernel, inv_s=1.0 / float(S),
                               use_mxu=params["use_mxu"])
    w1k, b1k, w2k, b2k = params["w1k"], params["b1k"], params["w2k"], params["b2k"]

    return pl.pallas_call(
        kernel,
        out_shape=jax.ShapeDtypeStruct((B, C, S), x3.dtype),
        grid_spec=pltpu.PrefetchScalarGridSpec(
            num_scalar_prefetch=0,
            grid=(B,),
            in_specs=[
                pl.BlockSpec((1, C, S), lambda b: (b, 0, 0)),
                pl.BlockSpec(w1k.shape, lambda b: (0, 0)),
                pl.BlockSpec(b1k.shape, lambda b: (0, 0)),
                pl.BlockSpec(w2k.shape, lambda b: (0, 0)),
                pl.BlockSpec(b2k.shape, lambda b: (0, 0)),
            ],
            out_specs=pl.BlockSpec((1, C, S), lambda b: (b, 0, 0)),
        ),
        compiler_params=pltpu.CompilerParams(
            dimension_semantics=("parallel",),
            vmem_limit_bytes=_vmem_limit(vmem, vmem_cap),
        ),
        cost_estimate=pl.CostEstimate(
            flops=2 * B * C * S + 4 * B * C * MID,
            transcendentals=B * C,
            bytes_accessed=2 * B * slab + wbytes),
    )(x3, w1k, b1k, w2k, b2k)


def _se_fallback(x3, params, vmem_cap):
    """3-phase path for per-sample slabs too large to keep resident in VMEM."""
    B, C, S = x3.shape
    itemsize = x3.dtype.itemsize

    tile_cap = (8 << 20) if vmem_cap >= (100 << 20) else (4 << 20)
    # Lane-dense spatial chunk (multiple of 128 when one divides S).
    CS = _pick_chunk(S, (8192, 4096, 2048, 1024, 512, 256, 128))
    max_cc = max(1, tile_cap // (CS * itemsize))
    if B == 1 and C >= 2:
        # v7x megacore: keep >= 2 "parallel" grid blocks even for batch 1.
        max_cc = min(max_cc, C // 2)
    CC = _largest_divisor_leq(C, max_cc)
    n_c, n_s = C // CC, S // CS

    tile_bytes = CC * CS * itemsize
    x_bytes = B * C * S * itemsize
    vec_bytes = B * C * 4

    # -- pass 1: per-(b, c) sums ---------------------------------------------
    pool_vmem = 2 * tile_bytes + CC * CS * 4 + 4 * CC * 4 + (2 << 20)
    sums = pl.pallas_call(
        _se_pool_kernel,
        out_shape=jax.ShapeDtypeStruct((B, C, 1), jnp.float32),
        grid_spec=pltpu.PrefetchScalarGridSpec(
            num_scalar_prefetch=0,
            grid=(B, n_c, n_s),
            in_specs=[pl.BlockSpec((1, CC, CS), lambda b, c, s: (b, c, s))],
            out_specs=pl.BlockSpec((1, CC, 1), lambda b, c, s: (b, c, 0)),
        ),
        compiler_params=pltpu.CompilerParams(
            dimension_semantics=("parallel", "parallel", "arbitrary"),
            vmem_limit_bytes=_vmem_limit(pool_vmem, vmem_cap),
        ),
        cost_estimate=pl.CostEstimate(
            flops=B * C * S, transcendentals=0,
            bytes_accessed=x_bytes + vec_bytes),
    )(x3)

    # -- gate: tiny batched GEMM in plain JAX (no dedicated kernel launch) ----
    means = sums[:, :, 0] * (1.0 / float(S))                                # (B, C)
    h = jnp.maximum(
        jnp.dot(means, params["w1t"], preferred_element_type=jnp.float32)
        + params["b1_row"], 0.0)                                            # (B, MID)
    gate = jax.nn.sigmoid(
        jnp.dot(h, params["w2t"], preferred_element_type=jnp.float32)
        + params["b2_row"])                                                 # (B, C)
    gate3 = gate[:, :, None]                                                # (B, C, 1) f32

    # -- pass 2: out = x * gate ------------------------------------------------
    scale_vmem = 4 * tile_bytes + 2 * CC * CS * 4 + 4 * CC * 4 + (2 << 20)
    out3 = pl.pallas_call(
        _se_scale_kernel,
        out_shape=jax.ShapeDtypeStruct((B, C, S), x3.dtype),
        grid_spec=pltpu.PrefetchScalarGridSpec(
            num_scalar_prefetch=0,
            grid=(B, n_c, n_s),
            in_specs=[
                pl.BlockSpec((1, CC, CS), lambda b, c, s: (b, c, s)),
                pl.BlockSpec((1, CC, 1), lambda b, c, s: (b, c, 0)),
            ],
            out_specs=pl.BlockSpec((1, CC, CS), lambda b, c, s: (b, c, s)),
        ),
        compiler_params=pltpu.CompilerParams(
            dimension_semantics=("parallel", "parallel", "parallel"),
            vmem_limit_bytes=_vmem_limit(scale_vmem, vmem_cap),
        ),
        cost_estimate=pl.CostEstimate(
            flops=B * C * S, transcendentals=0,
            bytes_accessed=2 * x_bytes + vec_bytes),
    )(x3, gate3)
    return out3


def se_forward(x, params, *, force_fallback=False):
    """Squeeze-and-excitation forward for NCHW input x with prepared params."""
    B, C, H, W = x.shape
    S = H * W
    x3 = x.reshape(B, C, S)
    vmem_cap = _vmem_capacity_bytes()
    slab_bytes = C * S * x.dtype.itemsize
    wbytes = (2 * C * params["MID"] + C + params["MID"]) * 4
    fused_slab_limit = (8 << 20) if vmem_cap >= (100 << 20) else (4 << 20)
    if (not force_fallback and slab_bytes <= fused_slab_limit
            and 2 * wbytes <= (4 << 20)):
        out3 = _se_fused(x3, params, vmem_cap)
    else:
        out3 = _se_fallback(x3, params, vmem_cap)
    return out3.reshape(B, C, H, W)


def se_layer_pallas(x, w1, b1, w2, b2, *, force_fallback=False):
    """Convenience wrapper taking raw PyTorch-layout fc1/fc2 weights."""
    return se_forward(x, prepare_se_params(w1, b1, w2, b2),
                      force_fallback=force_fallback)


class SELayer:
    """Mirror of the PyTorch SELayer module (forward only)."""

    def __init__(self, in_channels, reduction, *, key=None):
        mid = in_channels // reduction
        if key is None:
            key = jax.random.PRNGKey(0)
        k1, k2, k3, k4 = jax.random.split(key, 4)
        # PyTorch nn.Linear default init: U(-1/sqrt(fan_in), 1/sqrt(fan_in)).
        lim1 = 1.0 / (in_channels ** 0.5)
        lim2 = 1.0 / (mid ** 0.5)
        self.w1 = jax.random.uniform(k1, (mid, in_channels), jnp.float32, -lim1, lim1)
        self.b1 = jax.random.uniform(k2, (mid,), jnp.float32, -lim1, lim1)
        self.w2 = jax.random.uniform(k3, (in_channels, mid), jnp.float32, -lim2, lim2)
        self.b2 = jax.random.uniform(k4, (in_channels,), jnp.float32, -lim2, lim2)
        # Hoisted per-call weight preprocessing.
        self._params = prepare_se_params(self.w1, self.b1, self.w2, self.b2)

    def __call__(self, x, *, force_fallback=False):
        return se_forward(x, self._params, force_fallback=force_fallback)


if __name__ == "__main__":
    def reference(x, layer):
        pooled = jnp.mean(x, axis=(2, 3))                                   # (B, C)
        hidden = jnp.maximum(pooled @ layer.w1.T + layer.b1, 0.0)           # (B, MID)
        g = jax.nn.sigmoid(hidden @ layer.w2.T + layer.b2)                  # (B, C)
        return x * g[:, :, None, None]

    root = jax.random.PRNGKey(0)
    k_x1, k_p1, k_x2, k_p2 = jax.random.split(root, 4)

    # 1) Small shapes (tiny-layer gate path), fused single-pass kernel.
    B, C, H, W = 2, 4, 16, 16
    x = jax.random.normal(k_x1, (B, C, H, W), dtype=jnp.float32)
    layer = SELayer(in_channels=C, reduction=2, key=k_p1)
    out = jax.block_until_ready(layer(x))
    assert out.shape == x.shape and out.dtype == x.dtype
    ref = reference(x, layer)
    assert jnp.allclose(out, ref, atol=1e-5, rtol=1e-5), "fused (tiny-gate) mismatch"

    # 2) Same shapes through the chunked 3-phase fallback path.
    out_fb = jax.block_until_ready(layer(x, force_fallback=True))
    assert jnp.allclose(out_fb, ref, atol=1e-5, rtol=1e-5), "fallback mismatch"

    # 3) Larger layer exercising the MXU gate path inside the fused kernel.
    B2, C2, H2, W2 = 2, 256, 8, 8
    x2 = jax.random.normal(k_x2, (B2, C2, H2, W2), dtype=jnp.float32)
    layer2 = SELayer(in_channels=C2, reduction=16, key=k_p2)
    out2 = jax.block_until_ready(layer2(x2))
    ref2 = reference(x2, layer2)
    assert jnp.allclose(out2, ref2, atol=2e-5, rtol=2e-5), "fused (MXU-gate) mismatch"

    print("KERNEL_OK")
</pallas_src>

<mosaic_0001>
module attributes {stable_mosaic.version = 11 : i64} {
  func.func @_se_fused_kernel(%arg0: i32, %arg1: memref<1x4x256xf32, #tpu.memory_space<vmem>>, %arg2: memref<4x2xf32, #tpu.memory_space<vmem>>, %arg3: memref<1x2xf32, #tpu.memory_space<vmem>>, %arg4: memref<4x2xf32, #tpu.memory_space<vmem>>, %arg5: memref<4x1xf32, #tpu.memory_space<vmem>>, %arg6: memref<1x4x256xf32, #tpu.memory_space<vmem>>) attributes {dimension_semantics = [#tpu.dimension_semantics<parallel>], iteration_bounds = array<i64: 2>, scalar_prefetch = 0 : i64, scratch_operands = 0 : i64, tpu.core_type = #tpu.core_type<tc>, window_params = [{transform_indices = @transform_0, window_bounds = array<i64: 1, 4, 256>}, {pipeline_mode = #tpu.pipeline_mode<synchronous>, transform_indices = @transform_1, window_bounds = array<i64: 4, 2>}, {pipeline_mode = #tpu.pipeline_mode<synchronous>, transform_indices = @transform_2, window_bounds = array<i64: 1, 2>}, {pipeline_mode = #tpu.pipeline_mode<synchronous>, transform_indices = @transform_3, window_bounds = array<i64: 4, 2>}, {pipeline_mode = #tpu.pipeline_mode<synchronous>, transform_indices = @transform_4, window_bounds = array<i64: 4, 1>}, {transform_indices = @transform_5, window_bounds = array<i64: 1, 4, 256>}]} {
    %c0 = arith.constant 0 : index
    %c0_0 = arith.constant 0 : index
    %c0_1 = arith.constant 0 : index
    %0 = vector.load %arg1[%c0, %c0_0, %c0_1] : memref<1x4x256xf32, #tpu.memory_space<vmem>>, vector<1x4x256xf32>
    %1 = vector.shape_cast %0 : vector<1x4x256xf32> to vector<4x256xf32>
    %cst = arith.constant dense<0.000000e+00> : vector<4xf32>
    %2 = vector.multi_reduction <add>, %1, %cst [1] : vector<4x256xf32> to vector<4xf32>
    %3 = vector.shape_cast %2 : vector<4xf32> to vector<4x1xf32>
    %cst_2 = arith.constant 3.906250e-03 : f32
    %4 = vector.broadcast %cst_2 : f32 to vector<4x1xf32>
    %5 = arith.mulf %3, %4 : vector<4x1xf32>
    %c0_3 = arith.constant 0 : index
    %c0_4 = arith.constant 0 : index
    %6 = vector.load %arg2[%c0_3, %c0_4] : memref<4x2xf32, #tpu.memory_space<vmem>>, vector<4x2xf32>
    %7 = vector.broadcast %5 : vector<4x1xf32> to vector<4x2xf32>
    %8 = arith.mulf %6, %7 : vector<4x2xf32>
    %cst_5 = arith.constant dense<0.000000e+00> : vector<2xf32>
    %9 = vector.multi_reduction <add>, %8, %cst_5 [0] : vector<4x2xf32> to vector<2xf32>
    %10 = vector.shape_cast %9 : vector<2xf32> to vector<1x2xf32>
    %c0_6 = arith.constant 0 : index
    %c0_7 = arith.constant 0 : index
    %11 = vector.load %arg3[%c0_6, %c0_7] : memref<1x2xf32, #tpu.memory_space<vmem>>, vector<1x2xf32>
    %12 = arith.addf %10, %11 : vector<1x2xf32>
    %cst_8 = arith.constant 0.000000e+00 : f32
    %13 = vector.broadcast %cst_8 : f32 to vector<1x2xf32>
    %14 = arith.maximumf %12, %13 : vector<1x2xf32>
    %c0_9 = arith.constant 0 : index
    %c0_10 = arith.constant 0 : index
    %15 = vector.load %arg4[%c0_9, %c0_10] : memref<4x2xf32, #tpu.memory_space<vmem>>, vector<4x2xf32>
    %16 = vector.broadcast %14 : vector<1x2xf32> to vector<4x2xf32>
    %17 = arith.mulf %15, %16 : vector<4x2xf32>
    %cst_11 = arith.constant dense<0.000000e+00> : vector<4xf32>
    %18 = vector.multi_reduction <add>, %17, %cst_11 [1] : vector<4x2xf32> to vector<4xf32>
    %19 = vector.shape_cast %18 : vector<4xf32> to vector<4x1xf32>
    %c0_12 = arith.constant 0 : index
    %c0_13 = arith.constant 0 : index
    %20 = vector.load %arg5[%c0_12, %c0_13] : memref<4x1xf32, #tpu.memory_space<vmem>>, vector<4x1xf32>
    %21 = arith.addf %19, %20 : vector<4x1xf32>
    %cst_14 = arith.constant 0.000000e+00 : f32
    %22 = vector.broadcast %cst_14 : f32 to vector<4x1xf32>
    %23 = arith.subf %22, %21 : vector<4x1xf32>
    %24 = math.exp %23 : vector<4x1xf32>
    %cst_15 = arith.constant 1.000000e+00 : f32
    %25 = vector.broadcast %cst_15 : f32 to vector<4x1xf32>
    %26 = arith.addf %25, %24 : vector<4x1xf32>
    %cst_16 = arith.constant 1.000000e+00 : f32
    %27 = vector.broadcast %cst_16 : f32 to vector<4x1xf32>
    %28 = arith.divf %27, %26 : vector<4x1xf32>
    %29 = vector.broadcast %28 : vector<4x1xf32> to vector<4x256xf32>
    %30 = arith.mulf %1, %29 : vector<4x256xf32>
    %c0_17 = arith.constant 0 : index
    %c0_18 = arith.constant 0 : index
    %c0_19 = arith.constant 0 : index
    %31 = vector.load %arg6[%c0_17, %c0_18, %c0_19] : memref<1x4x256xf32, #tpu.memory_space<vmem>>, vector<1x4x256xf32>
    %32 = vector.shape_cast %31 : vector<1x4x256xf32> to vector<4x256xf32>
    %33 = vector.shape_cast %30 : vector<4x256xf32> to vector<1x4x256xf32>
    tpu.vector_store %arg6[%c0_17, %c0_18, %c0_19], %33 {strides = array<i32>} : memref<1x4x256xf32, #tpu.memory_space<vmem>>, vector<1x4x256xf32>,
    return
  }
  func.func @transform_0(%arg0: i32) -> (i32, i32, i32) {
    %c0_i32 = arith.constant 0 : i32
    %c0_i32_0 = arith.constant 0 : i32
    %c0_i32_1 = arith.constant 0 : i32
    return %arg0, %c0_i32, %c0_i32_0 : i32, i32, i32
  }
  func.func @transform_1(%arg0: i32) -> (i32, i32) {
    %c0_i32 = arith.constant 0 : i32
    %c0_i32_0 = arith.constant 0 : i32
    %c0_i32_1 = arith.constant 0 : i32
    return %c0_i32, %c0_i32_0 : i32, i32
  }
  func.func @transform_2(%arg0: i32) -> (i32, i32) {
    %c0_i32 = arith.constant 0 : i32
    %c0_i32_0 = arith.constant 0 : i32
    %c0_i32_1 = arith.constant 0 : i32
    return %c0_i32, %c0_i32_0 : i32, i32
  }
  func.func @transform_3(%arg0: i32) -> (i32, i32) {
    %c0_i32 = arith.constant 0 : i32
    %c0_i32_0 = arith.constant 0 : i32
    %c0_i32_1 = arith.constant 0 : i32
    return %c0_i32, %c0_i32_0 : i32, i32
  }
  func.func @transform_4(%arg0: i32) -> (i32, i32) {
    %c0_i32 = arith.constant 0 : i32
    %c0_i32_0 = arith.constant 0 : i32
    %c0_i32_1 = arith.constant 0 : i32
    return %c0_i32, %c0_i32_0 : i32, i32
  }
  func.func @transform_5(%arg0: i32) -> (i32, i32, i32) {
    %c0_i32 = arith.constant 0 : i32
    %c0_i32_0 = arith.constant 0 : i32
    %c0_i32_1 = arith.constant 0 : i32
    return %arg0, %c0_i32, %c0_i32_0 : i32, i32, i32
  }
}

</mosaic_0001>

<llo_original>
// kernel: tpu_custom_call.1
$region0: #{tpu_custom_call.1}
  #allocation0 [shape = 'u32[]', space=smem, size = 0x4, offset = 0x4, fixed_abs, tag = 'smem constant byte address 0x4 - core index']
  #allocation1 [shape = 'u32[144,128]{1,0:T(1,128)}', space=vmem, size = 0x12000, scoped, tag = 'internal scratch']
  %s0 = inlined_call_operand.vmem [shape: f32[2,4,256], index: 0, kind: input, shape index: {}]
  %s1 = inlined_call_operand.vmem [shape: f32[4,2], index: 1, kind: input, shape index: {}]
  %s2 = inlined_call_operand.vmem [shape: f32[1,2], index: 2, kind: input, shape index: {}]
  %s3 = inlined_call_operand.vmem [shape: f32[4,2], index: 3, kind: input, shape index: {}]
  %s4 = inlined_call_operand.vmem [shape: f32[4,1], index: 4, kind: input, shape index: {}]
  %s5 = inlined_call_operand.hbm [shape: f32[2,4,256], index: 5, kind: output, shape index: {}]
  %s6 = sld [smem:[#allocation0]]
  $region53: #{tpu_custom_call.1} parent=0
    _
  %s8 = ssub.s32 1, %s6
  %s9 = scalar_select 0, %s8, %s6
  $region1: #{tpu_custom_call.1} parent=0
    #allocation2 [shape = 'u8[8192]{0}', space=vmem, size = 0x2000, scoped, tag = 'output window, operand 0']
    #allocation3 [shape = 's32[2]{0}', space=sflag, size = 0x8, scoped, tag = 'scoped memory for tpu_custom_call.1']
    %10 = vsyncpa [#allocation3], 0
    %s11 = scalar_lea.sflag [#allocation3], 1
    %12 = vsyncpa %s11, 0
    loop: start=0, step=1, limit=4
    $region2: #{tpu_custom_call.1} parent=1 // loop_pre_header
      _
    $region3: #{tpu_custom_call.1} parent=1 // loop_header
      %s14 = sphi 0, %s18
      %p15 = scmp.ge.s32.totalorder %s14, 4
      %s24 = sphi 0, %s26
      %s27 = sphi 0, %s24
      %s28 = sphi 0, %s27
      %s44 = sphi 0, %s28
      %s48 = sphi 0, %s48
      %s50 = sphi 0, %s48
      %s51 = sphi 0, %s50
      %s65 = sphi 0, %s51
      %s69 = sphi 0, %s69
      %s71 = sphi 0, %s69
      %s72 = sphi 0, %s71
      %s86 = sphi 0, %s72
      %s90 = sphi 0, %s90
      %s92 = sphi 0, %s90
      %s93 = sphi 0, %s92
      %s107 = sphi 0, %s93
      %s111 = sphi 0, %s111
      %s113 = sphi 0, %s111
      %s114 = sphi 0, %s113
      %s128 = sphi 0, %s114
      %s134 = sphi 0, %s136
      %s137 = sphi 0, %s134
      %s138 = sphi 0, %s137
      %s154 = sphi 0, %s138
    $region4: #{tpu_custom_call.1} parent=1 // loop_header_branch
      %17 = sbr.rel (%p15) target = $region8
    $region5: #{tpu_custom_call.1} parent=1 // loop_body
      %s19 = ssub.s32 %s14, 1
      %s20 = ssub.s32 %s14, 2
      %s21 = sadd.s32 %s14, 1
      %s22 = ssub.s32 %s14, %s21
      %p23 = scmp.eq.s32.totalorder %s22, 0
      %s25 = sadd.s32 %s24, 1
      %s26 = scalar_select %p23, %s24, %s25
      %p29 = pneg %p23
      %p30 = scmp.eq.s32.totalorder %s14, 1
      %p31 = por %p29, %p30
      %p32 = scmp.ne.s32.totalorder %s24, %s27
      %p33 = scmp.eq.s32.totalorder %s14, 0
      %p34 = por %p32, %p33
      %p35 = scmp.ne.s32.totalorder %s24, %s27
      %p36 = scmp.eq.s32.totalorder %s19, 1
      %p37 = por %p35, %p36
      %p38 = scmp.ne.s32.totalorder %s27, %s28
      %p39 = scmp.eq.s32.totalorder %s19, 0
      %p40 = por %p38, %p39
      %p41 = scmp.ne.s32.totalorder %s27, %s28
      %p42 = scmp.eq.s32.totalorder %s20, 1
      %p43 = por %p41, %p42
      %p45 = scmp.ne.s32.totalorder %s28, %s44
      %p46 = scmp.eq.s32.totalorder %s20, 0
      %p47 = por %p45, %p46
      %s49 = sadd.s32 %s48, 1
      %p52 = scmp.eq.s32.totalorder %s14, 1
      %p53 = scmp.ne.s32.totalorder %s48, %s50
      %p54 = scmp.eq.s32.totalorder %s14, 0
      %p55 = por %p53, %p54
      %p56 = scmp.ne.s32.totalorder %s48, %s50
      %p57 = scmp.eq.s32.totalorder %s19, 1
      %p58 = por %p56, %p57
      %p59 = scmp.ne.s32.totalorder %s50, %s51
      %p60 = scmp.eq.s32.totalorder %s19, 0
      %p61 = por %p59, %p60
      %p62 = scmp.ne.s32.totalorder %s50, %s51
      %p63 = scmp.eq.s32.totalorder %s20, 1
      %p64 = por %p62, %p63
      %p66 = scmp.ne.s32.totalorder %s51, %s65
      %p67 = scmp.eq.s32.totalorder %s20, 0
      %p68 = por %p66, %p67
      %s70 = sadd.s32 %s69, 1
      %p73 = scmp.eq.s32.totalorder %s14, 1
      %p74 = scmp.ne.s32.totalorder %s69, %s71
      %p75 = scmp.eq.s32.totalorder %s14, 0
      %p76 = por %p74, %p75
      %p77 = scmp.ne.s32.totalorder %s69, %s71
      %p78 = scmp.eq.s32.totalorder %s19, 1
      %p79 = por %p77, %p78
      %p80 = scmp.ne.s32.totalorder %s71, %s72
      %p81 = scmp.eq.s32.totalorder %s19, 0
      %p82 = por %p80, %p81
      %p83 = scmp.ne.s32.totalorder %s71, %s72
      %p84 = scmp.eq.s32.totalorder %s20, 1
      %p85 = por %p83, %p84
      %p87 = scmp.ne.s32.totalorder %s72, %s86
      %p88 = scmp.eq.s32.totalorder %s20, 0
      %p89 = por %p87, %p88
      %s91 = sadd.s32 %s90, 1
      %p94 = scmp.eq.s32.totalorder %s14, 1
      %p95 = scmp.ne.s32.totalorder %s90, %s92
      %p96 = scmp.eq.s32.totalorder %s14, 0
      %p97 = por %p95, %p96
      %p98 = scmp.ne.s32.totalorder %s90, %s92
      %p99 = scmp.eq.s32.totalorder %s19, 1
      %p100 = por %p98, %p99
      %p101 = scmp.ne.s32.totalorder %s92, %s93
      %p102 = scmp.eq.s32.totalorder %s19, 0
      %p103 = por %p101, %p102
      %p104 = scmp.ne.s32.totalorder %s92, %s93
      %p105 = scmp.eq.s32.totalorder %s20, 1
      %p106 = por %p104, %p105
      %p108 = scmp.ne.s32.totalorder %s93, %s107
      %p109 = scmp.eq.s32.totalorder %s20, 0
      %p110 = por %p108, %p109
      %s112 = sadd.s32 %s111, 1
      %p115 = scmp.eq.s32.totalorder %s14, 1
      %p116 = scmp.ne.s32.totalorder %s111, %s113
      %p117 = scmp.eq.s32.totalorder %s14, 0
      %p118 = por %p116, %p117
      %p119 = scmp.ne.s32.totalorder %s111, %s113
      %p120 = scmp.eq.s32.totalorder %s19, 1
      %p121 = por %p119, %p120
      %p122 = scmp.ne.s32.totalorder %s113, %s114
      %p123 = scmp.eq.s32.totalorder %s19, 0
      %p124 = por %p122, %p123
      %p125 = scmp.ne.s32.totalorder %s113, %s114
      %p126 = scmp.eq.s32.totalorder %s20, 1
      %p127 = por %p125, %p126
      %p129 = scmp.ne.s32.totalorder %s114, %s128
      %p130 = scmp.eq.s32.totalorder %s20, 0
      %p131 = por %p129, %p130
      %s132 = ssub.s32 %s14, %s21
      %p133 = scmp.eq.s32.totalorder %s132, 0
      %s135 = sadd.s32 %s134, 1
      %s136 = scalar_select %p133, %s134, %s135
      %p139 = pneg %p133
      %p140 = scmp.eq.s32.totalorder %s14, 1
      %p141 = por %p139, %p140
      %p142 = scmp.ne.s32.totalorder %s134, %s137
      %p143 = scmp.eq.s32.totalorder %s14, 0
      %p144 = por %p142, %p143
      %p145 = scmp.ne.s32.totalorder %s134, %s137
      %p146 = scmp.eq.s32.totalorder %s19, 1
      %p147 = por %p145, %p146
      %p148 = scmp.ne.s32.totalorder %s137, %s138
      %p149 = scmp.eq.s32.totalorder %s19, 0
      %p150 = por %p148, %p149
      %p151 = scmp.ne.s32.totalorder %s137, %s138
      %p152 = scmp.eq.s32.totalorder %s20, 1
      %p153 = por %p151, %p152
      %p155 = scmp.ne.s32.totalorder %s138, %s154
      %p156 = scmp.eq.s32.totalorder %s20, 0
      %p157 = por %p155, %p156
      %p158 = scmp.le.s32.totalorder 1, %s14
      %p159 = scmp.lt.s32.totalorder %s14, 3
      %p160 = pnand %p158, %p159
      %p161 = pneg %p160
      // Predicated region
      $region9: #{tpu_custom_call.1} parent=5 // pred_check
        _
      $region10: #{tpu_custom_call.1} parent=5 // pred_check_branch
        %163 = sbr.rel (%p160) target = $region12
      $region11: #{tpu_custom_call.1} parent=5 // pred_region
        %s164 = ssub.s32 %s14, 1
        // Predicated region
        $region13: #{tpu_custom_call.1} parent=11 // pred_check
          %p165 = pneg %p61
        $region14: #{tpu_custom_call.1} parent=11 // pred_check_branch
          %167 = sbr.rel (%p165) target = $region16
        $region15: #{tpu_custom_call.1} parent=11 // pred_region
          _
        $region16: #{tpu_custom_call.1} parent=11 // pred_fallthru
          _
        // Predicated region
        $region17: #{tpu_custom_call.1} parent=11 // pred_check
          %p168 = pneg %p82
        $region18: #{tpu_custom_call.1} parent=11 // pred_check_branch
          %170 = sbr.rel (%p168) target = $region20
        $region19: #{tpu_custom_call.1} parent=11 // pred_region
          _
        $region20: #{tpu_custom_call.1} parent=11 // pred_fallthru
          _
        // Predicated region
        $region21: #{tpu_custom_call.1} parent=11 // pred_check
          %p171 = pneg %p103
        $region22: #{tpu_custom_call.1} parent=11 // pred_check_branch
          %173 = sbr.rel (%p171) target = $region24
        $region23: #{tpu_custom_call.1} parent=11 // pred_region
          _
        $region24: #{tpu_custom_call.1} parent=11 // pred_fallthru
          _
        // Predicated region
        $region25: #{tpu_custom_call.1} parent=11 // pred_check
          %p174 = pneg %p124
        $region26: #{tpu_custom_call.1} parent=11 // pred_check_branch
          %176 = sbr.rel (%p174) target = $region28
        $region27: #{tpu_custom_call.1} parent=11 // pred_region
          _
        $region28: #{tpu_custom_call.1} parent=11 // pred_fallthru
          _
      $region12: #{tpu_custom_call.1} parent=5 // pred_fallthru
        _
      %p177 = scmp.lt.s32.totalorder %s14, 2
      // Predicated region
      $region29: #{tpu_custom_call.1} parent=5 // pred_check
        %p178 = pneg %p177
      $region30: #{tpu_custom_call.1} parent=5 // pred_check_branch
        %180 = sbr.rel (%p178) target = $region32
      $region31: #{tpu_custom_call.1} parent=5 // pred_region
        // Predicated region
        $region33: #{tpu_custom_call.1} parent=31 // pred_check
          %p181 = pneg %p34
        $region34: #{tpu_custom_call.1} parent=31 // pred_check_branch
          %183 = sbr.rel (%p181) target = $region36
        $region35: #{tpu_custom_call.1} parent=31 // pred_region
          %p184 = scmp.lt.s32.totalorder %s14, 1
          %s185 = scalar_select %p184, %s14, 1
          %s186 = smul.addr %s185, 2
          %s187 = smul.addr %s186, 4
          %s188 = scalar_lea.vmem %s0, %s187
        $region36: #{tpu_custom_call.1} parent=31 // pred_fallthru
          _
      $region32: #{tpu_custom_call.1} parent=5 // pred_fallthru
        _
      %p189 = scmp.le.s32.totalorder 1, %s14
      %p190 = scmp.lt.s32.totalorder %s14, 3
      %p191 = pnand %p189, %p190
      %p192 = pneg %p191
      // Predicated region
      $region37: #{tpu_custom_call.1} parent=5 // pred_check
        _
      $region38: #{tpu_custom_call.1} parent=5 // pred_check_branch
        %194 = sbr.rel (%p191) target = $region40
      $region39: #{tpu_custom_call.1} parent=5 // pred_region
        %s195 = ssub.s32 %s14, 1
        %p196 = scmp.lt.s32.totalorder %s19, 1
        %s197 = scalar_select %p196, %s19, 1
        %s198 = smul.addr %s197, 2
        %s199 = smul.addr %s198, 4
        %s200 = scalar_lea.vmem %s0, %s199
        %p201 = pneg %p40
        %p202 = pneg %p37
        %p203 = pneg %p61
        %p204 = pneg %p58
        %p205 = pneg %p82
        %p206 = pneg %p79
        %p207 = pneg %p103
        %p208 = pneg %p100
        %p209 = pneg %p124
        %p210 = pneg %p121
        %p211 = pneg %p150
        %p212 = pneg %p147
        %s213 = sand.u32 %s137, 1
        %s214 = scalar_lea.sflag [#allocation3], %s213
        %s215 = sand.u32 %s137, 1
        %s216 = smul.addr %s215, 8
        %s217 = scalar_lea.vmem [#allocation2], %s216
        %p218 = scmp.lt.s32.totalorder %s19, 1
        %s219 = scalar_select %p218, %s19, 1
        %s220 = smul.addr %s219, 2
        %s221 = smul.addr %s220, 4
        %s222 = scalar_lea.vmem %s0, %s221
        %v223 = vld [vmem:[%s222] sm:$0xff]
        %v225 = vcombine.high %v223, %v223
        %vm227 = vcmask 1043456
        %v228 = vsel %vm227, %v223, 0.0
        %v229 = vsel %vm227, %v225, 0.0
        %v230 = vadd.f32 %v228, %v229
        %231 = vadd.xlane.f32.xlu0 %v230
        %v232 = vpop.xlane.xlu0 %231
        %v233 = vmul.f32 %v232, 0.00390625
        %v234 = vld [vmem:[%s1] sm:$0xf]
        %v235 = vmul.f32 %v234, %v233
        %vm236 = vcmask 11264
        %v237 = vsel %vm236, %v235, 0.0
        %v238 = vrot.slane %v237, 4
        %v239 = vadd.f32 %v237, %v238
        %v240 = vrot.slane %v239, 2
        %v241 = vadd.f32 %v239, %v240
        %v242 = vrot.slane %v241, 1
        %v243 = vadd.f32 %v241, %v242
        %v244 = vld [vmem:[%s2] sm:$0x1]
        %v245 = vadd.f32 %v243, %v244
        %v246 = vmax.f32 %v245, 0.0
        %v247 = vld [vmem:[%s3] sm:$0xf]
        %v248 = vlaneseq
        %v249 = vshrl.u32 %v248, 7
        %v250 = vsub.s32 0, %v249
        %v251 = vrot.slane %v246, %v250
        %v252 = vmul.f32 %v247, %v251
        %v253 = vsel %vm236, %v252, 0.0
        %254 = vadd.xlane.f32.xlu0 %v253
        %v255 = vpop.xlane.xlu0 %254
        %v256 = vld [vmem:[%s4] sm:$0xf]
        %v257 = vadd.f32 %v255, %v256
        %v258 = vsub.f32 0.0, %v257
        %v259 = vmul.f32 %v258, 1.442695
        %v260 = vpow.pop %v259
        %v261 = vadd.f32 %v260, 1.0
        %v262 = vrcp.pop %v261
        %v263 = vmul.f32 1.0, %v262
        %265 = vset.pattern.permute.xlu0 0
        %266 = vperm.xlu0 %265, %v263
        %v267 = vpop.permute.xlu0 %266
        %v269 = vunpack.c.l.s4 839922192
        %v270 = vunpack.c.0.s8 %v269
        %v271 = vlaneseq
        %v272 = vshrl.u32 %v271, 7
        %v273 = vsub.s32 %v270, %v272
        %v274 = vrot.slane %v267, %v273
        %v276 = vmul.f32 %v223, %v274
        %277 = vst [vmem:[%s217] sm:$0xff] %v276
        %s278 = sand.u32 %s137, 1
        %s279 = scalar_lea.sflag [#allocation3], %s278
        %s280 = sand.u32 %s137, 1
        %s281 = smul.addr %s280, 8
        %s282 = scalar_lea.vmem [#allocation2], %s281
        // Predicated region
        $region41: #{tpu_custom_call.1} parent=39 // pred_check
          %p283 = pneg %p147
        $region42: #{tpu_custom_call.1} parent=39 // pred_check_branch
          %285 = sbr.rel (%p283) target = $region44
        $region43: #{tpu_custom_call.1} parent=39 // pred_region
          %s287 = ssub.s32 128, 128
          %288 = vsyncadd %s279, %s287
          %s289 = smul.addr %s19, 2
          %s290 = smul.addr %s289, 64
          %s291 = scalar_lea.hbm %s5, %s290
          %s293 = sshll.u32 %s282, 4
          %s294 = int_to_ptr.vmem [resolvable:$true] %s293
          %296 = dma.vmem_to_hbm [thread:$0]  %s294, 128, %s291, %s279
        $region44: #{tpu_custom_call.1} parent=39 // pred_fallthru
          _
      $region40: #{tpu_custom_call.1} parent=5 // pred_fallthru
        _
      %p297 = scmp.le.s32.totalorder 2, %s14
      // Predicated region
      $region45: #{tpu_custom_call.1} parent=5 // pred_check
        %p298 = pneg %p297
      $region46: #{tpu_custom_call.1} parent=5 // pred_check_branch
        %300 = sbr.rel (%p298) target = $region48
      $region47: #{tpu_custom_call.1} parent=5 // pred_region
        %s301 = ssub.s32 %s14, 2
        // Predicated region
        $region49: #{tpu_custom_call.1} parent=47 // pred_check
          %p302 = pneg %p153
        $region50: #{tpu_custom_call.1} parent=47 // pred_check_branch
          %304 = sbr.rel (%p302) target = $region52
        $region51: #{tpu_custom_call.1} parent=47 // pred_region
          %s305 = sand.u32 %s138, 1
          %s306 = scalar_lea.sflag [#allocation3], %s305
          %s307 = sand.u32 %s138, 1
          %s308 = smul.addr %s307, 8
          %s309 = scalar_lea.vmem [#allocation2], %s308
          %310 = dma.done %s306, 128
        $region52: #{tpu_custom_call.1} parent=47 // pred_fallthru
          _
      $region48: #{tpu_custom_call.1} parent=5 // pred_fallthru
        _
    $region6: #{tpu_custom_call.1} parent=1 // loop_footer
      %s18 = sadd.s32 1, %s14
    $region7: #{tpu_custom_call.1} parent=1 // loop_footer_branch
      %13 = sbr.rel target = $region3
    $region8: #{tpu_custom_call.1} parent=1 // loop_exit
      _
    %311 = vsyncpa [#allocation3], 1
    %s312 = scalar_lea.sflag [#allocation3], 1
    %313 = vsyncpa %s312, 1

</llo_original>
